<compile_context>
chip_gen: v7x
topology: tpu7x:2x2x1
jax: 0.10.0
libtpu: 0.0.40
codegen_flags: <defaults>
</compile_context>

<pallas_src>
import functools

import jax
import jax.numpy as jnp
from jax.experimental import pallas as pl
from jax.experimental.pallas import tpu as pltpu

_LANES = 128


def _fused_heads_kernel(num_groups,
                        gid_ref, x_ref, w1_ref, b1_ref, lane_grp_ref,
                        grp_row_ref, w2_ref, b2g_ref, bgen_ref, out_ref):
    # First layer for ALL heads (G group heads + generic) in one MXU matmul:
    #   h = relu(x @ [W1_0 | W1_1 | ... | W1_{G-1} | Wg1] + [b1_* | bg1])
    h = jnp.dot(x_ref[...], w1_ref[...], preferred_element_type=jnp.float32)
    h = jnp.maximum(h + b1_ref[...], 0.0)                      # (TB, PH)

    gid = gid_ref[...]                                         # (TB, 1) int32
    lane_grp = lane_grp_ref[...]                               # (1, PH) int32

    # Keep only the lanes of this row's group block plus the generic block.
    keep = (lane_grp == gid) | (lane_grp == num_groups)        # (TB, PH) bool
    h = jnp.where(keep, h, 0.0)

    # Second layer: W2 is block-structured so one matmul yields
    #   cols [0,O)  : group-specific head output (only the selected block is
    #                 nonzero in h, so this equals h_g @ W2_g)
    #   cols [O,2O) : generic head output
    y = jnp.dot(h, w2_ref[...], preferred_element_type=jnp.float32)   # (TB, PO)

    # Per-row group bias b2[gid] via one-hot @ b2 matrix (rows padded to >=8);
    # generic bias is a plain broadcast row.
    onehot = (gid == grp_row_ref[...]).astype(jnp.float32)     # (TB, GP)
    y = y + jnp.dot(onehot, b2g_ref[...], preferred_element_type=jnp.float32)
    out_ref[...] = y + bgen_ref[...]                           # lane-dense store


def out_heads_with_generic_forward(x, gid, params):
    """x: (B, IN) f32, gid: (B,) int32 group index per sample.

    Returns (out, gen_out), each (B, O) f32.
    Note: rows with gid outside [0, G) get zeros in `out` (reference PyTorch
    code would KeyError on an unknown id).
    """
    B, IN = x.shape
    G, _, H = params["w1"].shape
    O = params["w2"].shape[-1]

    PH = pl.cdiv((G + 1) * H, _LANES) * _LANES     # padded fused-hidden width
    PO = pl.cdiv(2 * O, _LANES) * _LANES           # padded output width (out|gen)
    GP = max(8, pl.cdiv(G, 8) * 8)                 # padded one-hot width

    f32 = jnp.float32

    # ---- one-time weight packing (plain XLA ops, outside the kernel) ----
    # Fused first layer: column block g holds W1 of group g, last block = Wg1.
    w1_cat = jnp.concatenate(
        [jnp.transpose(params["w1"], (1, 0, 2)).reshape(IN, G * H),
         params["wg1"]], axis=1)
    w1p = jnp.zeros((IN, PH), f32).at[:, :(G + 1) * H].set(w1_cat)
    b1_cat = jnp.concatenate(
        [params["b1"][:, 0, :].reshape(1, G * H), params["bg1"]], axis=1)
    b1p = jnp.zeros((1, PH), f32).at[:, :(G + 1) * H].set(b1_cat)

    # Block-structured second layer: rows of group g -> output cols [0,O),
    # rows of the generic block -> output cols [O,2O).
    w2p = jnp.zeros((PH, PO), f32)
    for g in range(G):
        w2p = w2p.at[g * H:(g + 1) * H, 0:O].set(params["w2"][g])
    w2p = w2p.at[G * H:(G + 1) * H, O:2 * O].set(params["wg2"])

    b2g = jnp.zeros((GP, PO), f32).at[:G, 0:O].set(params["b2"][:, 0, :])
    bgen = jnp.zeros((1, PO), f32).at[:, O:2 * O].set(params["bg2"])

    # Lane -> group-block map (padded lanes get ids > G, never selected).
    lane_grp = (jnp.arange(PH, dtype=jnp.int32) // H).reshape(1, PH)
    grp_row = jnp.arange(GP, dtype=jnp.int32).reshape(1, GP)

    # ---- batch tiling (single step here; "parallel" axis for v7x megacore) --
    TB = B if B <= 128 else 128
    Bp = pl.cdiv(B, TB) * TB
    if Bp != B:
        x = jnp.pad(x, ((0, Bp - B), (0, 0)))
        gid = jnp.pad(gid, (0, Bp - B))
    gid_col = gid.reshape(Bp, 1).astype(jnp.int32)

    kernel = functools.partial(_fused_heads_kernel, G)

    slab = pl.pallas_call(
        kernel,
        out_shape=jax.ShapeDtypeStruct((Bp, PO), f32),
        grid_spec=pltpu.PrefetchScalarGridSpec(
            num_scalar_prefetch=0,
            grid=(Bp // TB,),
            in_specs=[
                pl.BlockSpec((TB, 1), lambda i: (i, 0)),     # gid
                pl.BlockSpec((TB, IN), lambda i: (i, 0)),    # x
                pl.BlockSpec((IN, PH), lambda i: (0, 0)),    # fused W1
                pl.BlockSpec((1, PH), lambda i: (0, 0)),     # fused b1
                pl.BlockSpec((1, PH), lambda i: (0, 0)),     # lane->group map
                pl.BlockSpec((1, GP), lambda i: (0, 0)),     # group-id row
                pl.BlockSpec((PH, PO), lambda i: (0, 0)),    # block-structured W2
                pl.BlockSpec((GP, PO), lambda i: (0, 0)),    # per-group b2
                pl.BlockSpec((1, PO), lambda i: (0, 0)),     # generic b2
            ],
            out_specs=pl.BlockSpec((TB, PO), lambda i: (i, 0)),
        ),
        compiler_params=pltpu.CompilerParams(
            dimension_semantics=("parallel",)),
    )(gid_col, x, w1p, b1p, lane_grp, grp_row, w2p, b2g, bgen)

    return slab[:B, :O], slab[:B, O:2 * O]


def _ref_forward(x, gid, params):
    """Pure-JAX reference of the PyTorch per-sample loop (vectorized)."""
    w1 = params["w1"][gid]                       # (B, IN, H)
    b1 = params["b1"][gid][:, 0, :]              # (B, H)
    w2 = params["w2"][gid]                       # (B, H, O)
    b2 = params["b2"][gid][:, 0, :]              # (B, O)
    h = jnp.maximum(jnp.einsum("bi,bih->bh", x, w1) + b1, 0.0)
    out = jnp.einsum("bh,bho->bo", h, w2) + b2
    hg = jnp.maximum(x @ params["wg1"] + params["bg1"], 0.0)
    gen = hg @ params["wg2"] + params["bg2"]
    return out, gen


if __name__ == "__main__":
    # Module-equivalent setup: students -> group names -> group indices.
    groups = {
        "stu_alice": "grpA", "stu_bob": "grpB", "stu_carol": "grpC",
        "stu_dave": "grpA", "stu_erin": "grpB", "stu_frank": "grpC",
        "stu_gina": "grpA", "stu_hank": "grpB",
    }
    group_names = sorted(set(groups.values()))           # deterministic order
    group_to_idx = {g: i for i, g in enumerate(group_names)}
    name_to_group = {k.split("_")[1]: v for k, v in groups.items()}

    ids = ["alice", "bob", "carol", "dave", "erin", "frank", "gina", "hank"]

    B, IN, H, O = len(ids), 32, 32, 8
    G = len(group_names)

    key = jax.random.PRNGKey(0)
    ks = jax.random.split(key, 9)
    scale = 0.1
    params = {
        "w1": scale * jax.random.normal(ks[0], (G, IN, H), jnp.float32),
        "b1": scale * jax.random.normal(ks[1], (G, 1, H), jnp.float32),
        "w2": scale * jax.random.normal(ks[2], (G, H, O), jnp.float32),
        "b2": scale * jax.random.normal(ks[3], (G, 1, O), jnp.float32),
        "wg1": scale * jax.random.normal(ks[4], (IN, H), jnp.float32),
        "bg1": scale * jax.random.normal(ks[5], (1, H), jnp.float32),
        "wg2": scale * jax.random.normal(ks[6], (H, O), jnp.float32),
        "bg2": scale * jax.random.normal(ks[7], (1, O), jnp.float32),
    }

    x = jax.random.normal(ks[8], (B, IN), jnp.float32)
    gid = jnp.array([group_to_idx[name_to_group[i]] for i in ids], jnp.int32)

    out, gen_out = out_heads_with_generic_forward(x, gid, params)
    out = jax.block_until_ready(out)
    gen_out = jax.block_until_ready(gen_out)

    out_ref, gen_ref = _ref_forward(x, gid, params)
    assert jnp.allclose(out, out_ref, atol=1e-5), "group-head output mismatch"
    assert jnp.allclose(gen_out, gen_ref, atol=1e-5), "generic output mismatch"

    print("KERNEL_OK")
</pallas_src>

<mosaic_0001>
module attributes {stable_mosaic.version = 11 : i64} {
  func.func @_fused_heads_kernel(%arg0: i32, %arg1: memref<8x1xi32, #tpu.memory_space<vmem>>, %arg2: memref<8x32xf32, #tpu.memory_space<vmem>>, %arg3: memref<32x128xf32, #tpu.memory_space<vmem>>, %arg4: memref<1x128xf32, #tpu.memory_space<vmem>>, %arg5: memref<1x128xi32, #tpu.memory_space<vmem>>, %arg6: memref<1x8xi32, #tpu.memory_space<vmem>>, %arg7: memref<128x128xf32, #tpu.memory_space<vmem>>, %arg8: memref<8x128xf32, #tpu.memory_space<vmem>>, %arg9: memref<1x128xf32, #tpu.memory_space<vmem>>, %arg10: memref<8x128xf32, #tpu.memory_space<vmem>>) attributes {dimension_semantics = [#tpu.dimension_semantics<parallel>], iteration_bounds = array<i64: 1>, scalar_prefetch = 0 : i64, scratch_operands = 0 : i64, tpu.core_type = #tpu.core_type<tc>, window_params = [{transform_indices = @transform_0, window_bounds = array<i64: 8, 1>}, {transform_indices = @transform_1, window_bounds = array<i64: 8, 32>}, {pipeline_mode = #tpu.pipeline_mode<synchronous>, transform_indices = @transform_2, window_bounds = array<i64: 32, 128>}, {pipeline_mode = #tpu.pipeline_mode<synchronous>, transform_indices = @transform_3, window_bounds = array<i64: 1, 128>}, {pipeline_mode = #tpu.pipeline_mode<synchronous>, transform_indices = @transform_4, window_bounds = array<i64: 1, 128>}, {pipeline_mode = #tpu.pipeline_mode<synchronous>, transform_indices = @transform_5, window_bounds = array<i64: 1, 8>}, {pipeline_mode = #tpu.pipeline_mode<synchronous>, transform_indices = @transform_6, window_bounds = array<i64: 128, 128>}, {pipeline_mode = #tpu.pipeline_mode<synchronous>, transform_indices = @transform_7, window_bounds = array<i64: 8, 128>}, {pipeline_mode = #tpu.pipeline_mode<synchronous>, transform_indices = @transform_8, window_bounds = array<i64: 1, 128>}, {transform_indices = @transform_9, window_bounds = array<i64: 8, 128>}]} {
    %c0 = arith.constant 0 : index
    %c0_0 = arith.constant 0 : index
    %0 = vector.load %arg2[%c0, %c0_0] : memref<8x32xf32, #tpu.memory_space<vmem>>, vector<8x32xf32>
    %c0_1 = arith.constant 0 : index
    %c0_2 = arith.constant 0 : index
    %1 = vector.load %arg3[%c0_1, %c0_2] : memref<32x128xf32, #tpu.memory_space<vmem>>, vector<32x128xf32>
    %cst = arith.constant dense<0.000000e+00> : vector<8x128xf32>
    %2 = tpu.matmul %0, %1, %cst {dimension_numbers = #tpu.dot_dimension_numbers<[1], [0], [0], [1], [0, 0, 1, 1], [], []>} : vector<8x32xf32>, vector<32x128xf32>, vector<8x128xf32> -> vector<8x128xf32>
    %c0_3 = arith.constant 0 : index
    %c0_4 = arith.constant 0 : index
    %3 = vector.load %arg4[%c0_3, %c0_4] : memref<1x128xf32, #tpu.memory_space<vmem>>, vector<1x128xf32>
    %4 = vector.broadcast %3 : vector<1x128xf32> to vector<8x128xf32>
    %5 = arith.addf %2, %4 : vector<8x128xf32>
    %cst_5 = arith.constant 0.000000e+00 : f32
    %6 = vector.broadcast %cst_5 : f32 to vector<8x128xf32>
    %7 = arith.maximumf %5, %6 : vector<8x128xf32>
    %c0_6 = arith.constant 0 : index
    %c0_7 = arith.constant 0 : index
    %8 = vector.load %arg1[%c0_6, %c0_7] : memref<8x1xi32, #tpu.memory_space<vmem>>, vector<8x1xi32>
    %c0_8 = arith.constant 0 : index
    %c0_9 = arith.constant 0 : index
    %9 = vector.load %arg5[%c0_8, %c0_9] : memref<1x128xi32, #tpu.memory_space<vmem>>, vector<1x128xi32>
    %10 = vector.broadcast %9 : vector<1x128xi32> to vector<8x128xi32>
    %11 = vector.broadcast %8 : vector<8x1xi32> to vector<8x128xi32>
    %12 = arith.cmpi eq, %10, %11 : vector<8x128xi32>
    %c3_i32 = arith.constant 3 : i32
    %13 = vector.broadcast %c3_i32 : i32 to vector<1x128xi32>
    %14 = arith.cmpi eq, %9, %13 : vector<1x128xi32>
    %15 = vector.broadcast %14 : vector<1x128xi1> to vector<8x128xi1>
    %16 = arith.ori %12, %15 : vector<8x128xi1>
    %cst_10 = arith.constant 0.000000e+00 : f32
    %17 = vector.broadcast %cst_10 : f32 to vector<8x128xf32>
    %18 = arith.select %16, %7, %17 : vector<8x128xi1>, vector<8x128xf32>
    %c0_11 = arith.constant 0 : index
    %c0_12 = arith.constant 0 : index
    %19 = vector.load %arg7[%c0_11, %c0_12] : memref<128x128xf32, #tpu.memory_space<vmem>>, vector<128x128xf32>
    %cst_13 = arith.constant dense<0.000000e+00> : vector<8x128xf32>
    %20 = tpu.matmul %18, %19, %cst_13 {dimension_numbers = #tpu.dot_dimension_numbers<[1], [0], [0], [1], [0, 0, 1, 1], [], []>} : vector<8x128xf32>, vector<128x128xf32>, vector<8x128xf32> -> vector<8x128xf32>
    %c0_14 = arith.constant 0 : index
    %c0_15 = arith.constant 0 : index
    %21 = vector.load %arg6[%c0_14, %c0_15] : memref<1x8xi32, #tpu.memory_space<vmem>>, vector<1x8xi32>
    %22 = vector.broadcast %8 : vector<8x1xi32> to vector<8x8xi32>
    %23 = vector.broadcast %21 : vector<1x8xi32> to vector<8x8xi32>
    %24 = arith.cmpi eq, %22, %23 : vector<8x8xi32>
    %25 = arith.extui %24 : vector<8x8xi1> to vector<8x8xi32>
    %26 = arith.sitofp %25 : vector<8x8xi32> to vector<8x8xf32>
    %c0_16 = arith.constant 0 : index
    %c0_17 = arith.constant 0 : index
    %27 = vector.load %arg8[%c0_16, %c0_17] : memref<8x128xf32, #tpu.memory_space<vmem>>, vector<8x128xf32>
    %cst_18 = arith.constant dense<0.000000e+00> : vector<8x128xf32>
    %28 = tpu.matmul %26, %27, %cst_18 {dimension_numbers = #tpu.dot_dimension_numbers<[1], [0], [0], [1], [0, 0, 1, 1], [], []>} : vector<8x8xf32>, vector<8x128xf32>, vector<8x128xf32> -> vector<8x128xf32>
    %29 = arith.addf %20, %28 : vector<8x128xf32>
    %c0_19 = arith.constant 0 : index
    %c0_20 = arith.constant 0 : index
    %30 = vector.load %arg9[%c0_19, %c0_20] : memref<1x128xf32, #tpu.memory_space<vmem>>, vector<1x128xf32>
    %31 = vector.broadcast %30 : vector<1x128xf32> to vector<8x128xf32>
    %32 = arith.addf %29, %31 : vector<8x128xf32>
    %c0_21 = arith.constant 0 : index
    %c0_22 = arith.constant 0 : index
    %33 = vector.load %arg10[%c0_21, %c0_22] : memref<8x128xf32, #tpu.memory_space<vmem>>, vector<8x128xf32>
    tpu.vector_store %arg10[%c0_21, %c0_22], %32 {strides = array<i32>} : memref<8x128xf32, #tpu.memory_space<vmem>>, vector<8x128xf32>,
    return
  }
  func.func @transform_0(%arg0: i32) -> (i32, i32) {
    %c0_i32 = arith.constant 0 : i32
    %c0_i32_0 = arith.constant 0 : i32
    return %arg0, %c0_i32 : i32, i32
  }
  func.func @transform_1(%arg0: i32) -> (i32, i32) {
    %c0_i32 = arith.constant 0 : i32
    %c0_i32_0 = arith.constant 0 : i32
    return %arg0, %c0_i32 : i32, i32
  }
  func.func @transform_2(%arg0: i32) -> (i32, i32) {
    %c0_i32 = arith.constant 0 : i32
    %c0_i32_0 = arith.constant 0 : i32
    %c0_i32_1 = arith.constant 0 : i32
    return %c0_i32, %c0_i32_0 : i32, i32
  }
  func.func @transform_3(%arg0: i32) -> (i32, i32) {
    %c0_i32 = arith.constant 0 : i32
    %c0_i32_0 = arith.constant 0 : i32
    %c0_i32_1 = arith.constant 0 : i32
    return %c0_i32, %c0_i32_0 : i32, i32
  }
  func.func @transform_4(%arg0: i32) -> (i32, i32) {
    %c0_i32 = arith.constant 0 : i32
    %c0_i32_0 = arith.constant 0 : i32
    %c0_i32_1 = arith.constant 0 : i32
    return %c0_i32, %c0_i32_0 : i32, i32
  }
  func.func @transform_5(%arg0: i32) -> (i32, i32) {
    %c0_i32 = arith.constant 0 : i32
    %c0_i32_0 = arith.constant 0 : i32
    %c0_i32_1 = arith.constant 0 : i32
    return %c0_i32, %c0_i32_0 : i32, i32
  }
  func.func @transform_6(%arg0: i32) -> (i32, i32) {
    %c0_i32 = arith.constant 0 : i32
    %c0_i32_0 = arith.constant 0 : i32
    %c0_i32_1 = arith.constant 0 : i32
    return %c0_i32, %c0_i32_0 : i32, i32
  }
  func.func @transform_7(%arg0: i32) -> (i32, i32) {
    %c0_i32 = arith.constant 0 : i32
    %c0_i32_0 = arith.constant 0 : i32
    %c0_i32_1 = arith.constant 0 : i32
    return %c0_i32, %c0_i32_0 : i32, i32
  }
  func.func @transform_8(%arg0: i32) -> (i32, i32) {
    %c0_i32 = arith.constant 0 : i32
    %c0_i32_0 = arith.constant 0 : i32
    %c0_i32_1 = arith.constant 0 : i32
    return %c0_i32, %c0_i32_0 : i32, i32
  }
  func.func @transform_9(%arg0: i32) -> (i32, i32) {
    %c0_i32 = arith.constant 0 : i32
    %c0_i32_0 = arith.constant 0 : i32
    return %arg0, %c0_i32 : i32, i32
  }
}

</mosaic_0001>

<llo_original>
// kernel: tpu_custom_call.1
$region0: #{tpu_custom_call.1}
  #allocation0 [shape = 'u32[]', space=smem, size = 0x4, offset = 0x4, fixed_abs, tag = 'smem constant byte address 0x4 - core index']
  #allocation1 [shape = 'u32[144,128]{1,0:T(1,128)}', space=vmem, size = 0x12000, scoped, tag = 'internal scratch']
  %s0 = inlined_call_operand.vmem [shape: s32[8,1], index: 0, kind: input, shape index: {}]
  %s1 = inlined_call_operand.vmem [shape: f32[8,32], index: 1, kind: input, shape index: {}]
  %s2 = inlined_call_operand.hbm [shape: f32[32,128], index: 2, kind: input, shape index: {}]
  %s3 = inlined_call_operand.vmem [shape: f32[1,128], index: 3, kind: input, shape index: {}]
  %s4 = inlined_call_operand.vmem [shape: s32[1,128], index: 4, kind: input, shape index: {}]
  %s5 = inlined_call_operand.vmem [shape: s32[1,8], index: 5, kind: input, shape index: {}]
  %s6 = inlined_call_operand.hbm [shape: f32[128,128], index: 6, kind: input, shape index: {}]
  %s7 = inlined_call_operand.vmem [shape: f32[8,128], index: 7, kind: input, shape index: {}]
  %s8 = inlined_call_operand.vmem [shape: f32[1,128], index: 8, kind: input, shape index: {}]
  %s9 = inlined_call_operand.hbm [shape: f32[8,128], index: 9, kind: output, shape index: {}]
  %s10 = sld [smem:[#allocation0]]
  $region54: #{tpu_custom_call.1} parent=0
    _
  %s12 = ssub.s32 1, %s10
  %s13 = scalar_select 0, %s12, %s10
  $region1: #{tpu_custom_call.1} parent=0
    #allocation2 [shape = 'u8[16384]{0}', space=vmem, size = 0x4000, scoped, tag = 'input window, operand 2, single buffered']
    #allocation3 [shape = 's32[1]{0}', space=sflag, size = 0x4, scoped, tag = 'scoped memory for tpu_custom_call.1']
    #allocation4 [shape = 's32[1]{0}', space=sflag, size = 0x4, scoped, tag = 'scoped memory for tpu_custom_call.1']
    #allocation5 [shape = 'u8[65536]{0}', space=vmem, size = 0x10000, scoped, tag = 'input window, operand 6, single buffered']
    #allocation6 [shape = 's32[1]{0}', space=sflag, size = 0x4, scoped, tag = 'scoped memory for tpu_custom_call.1']
    #allocation7 [shape = 'u8[4096]{0}', space=vmem, size = 0x1000, scoped, tag = 'output window, operand 0, single buffered']
    %14 = vsyncpa [#allocation3], 0
    %15 = vsyncpa [#allocation6], 0
    %16 = vsyncpa [#allocation4], 0
    // Predicated region
    $region2: #{tpu_custom_call.1} parent=1 // pred_check
      _
    $region3: #{tpu_custom_call.1} parent=1 // pred_check_branch
      %18 = sbr.rel (0) target = $region5
    $region4: #{tpu_custom_call.1} parent=1 // pred_region
      _
    $region5: #{tpu_custom_call.1} parent=1 // pred_fallthru
      _
    // Predicated region
    $region6: #{tpu_custom_call.1} parent=1 // pred_check
      _
    $region7: #{tpu_custom_call.1} parent=1 // pred_check_branch
      %20 = sbr.rel (0) target = $region9
    $region8: #{tpu_custom_call.1} parent=1 // pred_region
      _
    $region9: #{tpu_custom_call.1} parent=1 // pred_fallthru
      _
    // Predicated region
    $region10: #{tpu_custom_call.1} parent=1 // pred_check
      _
    $region11: #{tpu_custom_call.1} parent=1 // pred_check_branch
      %22 = sbr.rel (0) target = $region13
    $region12: #{tpu_custom_call.1} parent=1 // pred_region
      %s24 = ssub.s32 512, 512
      %25 = vsyncadd [#allocation3], %s24
      %s26 = sshll.u32 [#allocation2], 4
      %s27 = int_to_ptr.vmem [resolvable:$true] %s26
      %32 = dma.hbm_to_vmem [thread:$0]  %s2, 512, %s27, [#allocation3], 128, 128, 8
    $region13: #{tpu_custom_call.1} parent=1 // pred_fallthru
      _
    // Predicated region
    $region14: #{tpu_custom_call.1} parent=1 // pred_check
      _
    $region15: #{tpu_custom_call.1} parent=1 // pred_check_branch
      %34 = sbr.rel (0) target = $region17
    $region16: #{tpu_custom_call.1} parent=1 // pred_region
      _
    $region17: #{tpu_custom_call.1} parent=1 // pred_fallthru
      _
    // Predicated region
    $region18: #{tpu_custom_call.1} parent=1 // pred_check
      _
    $region19: #{tpu_custom_call.1} parent=1 // pred_check_branch
      %36 = sbr.rel (0) target = $region21
    $region20: #{tpu_custom_call.1} parent=1 // pred_region
      _
    $region21: #{tpu_custom_call.1} parent=1 // pred_fallthru
      _
    // Predicated region
    $region22: #{tpu_custom_call.1} parent=1 // pred_check
      _
    $region23: #{tpu_custom_call.1} parent=1 // pred_check_branch
      %38 = sbr.rel (0) target = $region25
    $region24: #{tpu_custom_call.1} parent=1 // pred_region
      _
    $region25: #{tpu_custom_call.1} parent=1 // pred_fallthru
      _
    // Predicated region
    $region26: #{tpu_custom_call.1} parent=1 // pred_check
      _
    $region27: #{tpu_custom_call.1} parent=1 // pred_check_branch
      %40 = sbr.rel (0) target = $region29
    $region28: #{tpu_custom_call.1} parent=1 // pred_region
      %s42 = ssub.s32 2048, 2048
      %43 = vsyncadd [#allocation6], %s42
      %s44 = sshll.u32 [#allocation5], 4
      %s45 = int_to_ptr.vmem [resolvable:$true] %s44
      %50 = dma.hbm_to_vmem [thread:$0]  %s6, 2048, %s45, [#allocation6], 128, 128, 8
    $region29: #{tpu_custom_call.1} parent=1 // pred_fallthru
      _
    // Predicated region
    $region30: #{tpu_custom_call.1} parent=1 // pred_check
      _
    $region31: #{tpu_custom_call.1} parent=1 // pred_check_branch
      %52 = sbr.rel (0) target = $region33
    $region32: #{tpu_custom_call.1} parent=1 // pred_region
      _
    $region33: #{tpu_custom_call.1} parent=1 // pred_fallthru
      _
    // Predicated region
    $region34: #{tpu_custom_call.1} parent=1 // pred_check
      _
    $region35: #{tpu_custom_call.1} parent=1 // pred_check_branch
      %54 = sbr.rel (0) target = $region37
    $region36: #{tpu_custom_call.1} parent=1 // pred_region
      _
    $region37: #{tpu_custom_call.1} parent=1 // pred_fallthru
      _
    // Predicated region
    $region38: #{tpu_custom_call.1} parent=1 // pred_check
      _
    $region39: #{tpu_custom_call.1} parent=1 // pred_check_branch
      %56 = sbr.rel (0) target = $region41
    $region40: #{tpu_custom_call.1} parent=1 // pred_region
      %57 = dma.done [#allocation3], 512
    $region41: #{tpu_custom_call.1} parent=1 // pred_fallthru
      _
    // Predicated region
    $region42: #{tpu_custom_call.1} parent=1 // pred_check
      _
    $region43: #{tpu_custom_call.1} parent=1 // pred_check_branch
      %59 = sbr.rel (0) target = $region45
    $region44: #{tpu_custom_call.1} parent=1 // pred_region
      %60 = dma.done [#allocation6], 2048
    $region45: #{tpu_custom_call.1} parent=1 // pred_fallthru
      _
    %v61 = vld [vmem:[%s1] sm:$0xff]
    %v62 = vld [vmem:[#allocation2] sm:$0xff]
    %v63 = vld [vmem:[#allocation2 + $0x8] sm:$0xff]
    %v64 = vld [vmem:[#allocation2 + $0x10] sm:$0xff]
    %v65 = vld [vmem:[#allocation2 + $0x18] sm:$0xff]
    %v66 = vld [vmem:[%s3] sm:$0x1]
    %v68 = vlaneseq
    %v69 = vshrl.u32 %v68, 7
    %v70 = vsub.s32 0, %v69
    %v71 = vrot.slane %v66, %v70
    %vm73 = vcmask 261120
    %v75 = vsel %vm73, %v61, 0
    %77 = vmatprep.subr.mxu0 0.0
    %78 = vmatpush1.msra.mxu0 %v62
    %79 = vmatprep.subr.mxu0 0.0
    %80 = vmatpush1.msra.mxu0 %v63
    %81 = vmatprep.subr.mxu0 0.0
    %82 = vmatpush1.msra.mxu0 %v64
    %83 = vmatprep.subr.mxu0 0.0
    %84 = vmatpush1.msra.mxu0 %v65
    %85 = vmatprep.subr.mxu0 0.0
    %86 = vmatpush1.msra.mxu0 0.0
    %87 = vmatprep.subr.mxu0 0.0
    %88 = vmatpush1.msra.mxu0 0.0
    %89 = vmatprep.subr.mxu0 0.0
    %90 = vmatpush1.msra.mxu0 0.0
    %91 = vmatprep.subr.mxu0 0.0
    %92 = vmatpush1.msra.mxu0 0.0
    %93 = vmatprep.subr.mxu0 0.0
    %94 = vmatpush1.msra.mxu0 0.0
    %95 = vmatprep.subr.mxu0 0.0
    %96 = vmatpush1.msra.mxu0 0.0
    %97 = vmatprep.subr.mxu0 0.0
    %98 = vmatpush1.msra.mxu0 0.0
    %99 = vmatprep.subr.mxu0 0.0
    %100 = vmatpush1.msra.mxu0 0.0
    %101 = vmatprep.subr.mxu0 0.0
    %102 = vmatpush1.msra.mxu0 0.0
    %103 = vmatprep.subr.mxu0 0.0
    %104 = vmatpush1.msra.mxu0 0.0
    %105 = vmatprep.subr.mxu0 0.0
    %106 = vmatpush1.msra.mxu0 0.0
    %107 = vmatprep.subr.mxu0 0.0
    %108 = vmatpush1.msra.mxu0 0.0
    %109 = vmatprep.subr.mxu0 0.0
    %110 = vmatpush1.msra.mxu0 0.0
    %111 = vmatprep.subr.mxu0 0.0
    %112 = vmatpush1.msra.mxu0 0.0
    %113 = vmatprep.subr.mxu0 0.0
    %114 = vmatpush1.msra.mxu0 0.0
    %115 = vmatprep.subr.mxu0 0.0
    %116 = vmatpush1.msra.mxu0 0.0
    %117 = vmatprep.subr.mxu0 0.0
    %118 = vmatpush1.msra.mxu0 0.0
    %119 = vmatprep.subr.mxu0 0.0
    %120 = vmatpush1.msra.mxu0 0.0
    %121 = vmatprep.subr.mxu0 0.0
    %122 = vmatpush1.msra.mxu0 0.0
    %123 = vmatprep.subr.mxu0 0.0
    %124 = vmatpush1.msra.mxu0 0.0
    %125 = vmatprep.subr.mxu0 0.0
    %126 = vmatpush1.msra.mxu0 0.0
    %127 = vmatprep.subr.mxu0 0.0
    %128 = vmatpush1.msra.mxu0 0.0
    %129 = vmatprep.subr.mxu0 0.0
    %130 = vmatpush1.msra.mxu0 0.0
    %131 = vmatprep.subr.mxu0 0.0
    %132 = vmatpush1.msra.mxu0 0.0
    %133 = vmatprep.subr.mxu0 0.0
    %134 = vmatpush1.msra.mxu0 0.0
    %135 = vmatprep.subr.mxu0 0.0
    %136 = vmatpush1.msra.mxu0 0.0
    %137 = vmatprep.subr.mxu0 0.0
    %138 = vmatpush1.msra.mxu0 0.0
    %139 = vmatprep.subr.mxu0 0.0
    %140 = vmatpush1.msra.mxu0 0.0
    %141 = vmatprep.mubr.f32.mxu0 0.0
    %142 = vmatmul.mubr.f32.gmra.mrb[0].mxu0 %v75
    %v143 = vpop.f32.mrb[0].mxu0
    %v144 = vadd.f32 %v71, %v143
    %v145 = vpop.f32.mrb[0].mxu0
    %146 = vdwg.mxu0
    %v147 = vmax.f32 %v144, 0.0
    %v148 = vld [vmem:[%s0] sm:$0xff]
    %v149 = vld [vmem:[%s4] sm:$0x1]
    %v150 = vlaneseq
    %v151 = vshrl.u32 %v150, 7
    %v152 = vsub.s32 0, %v151
    %v153 = vrot.slane %v149, %v152
    %154 = vset.pattern.permute.xlu0 0
    %155 = vperm.xlu0 %154, %v148
    %v156 = vpop.permute.xlu0 %155
    %vm157 = vcmp.eq.s32.totalorder %v153, %v156
    %vm158 = vcmp.eq.s32.totalorder %v149, 3
    %v159 = vsel %vm158, 1, 0
    %v160 = vlaneseq
    %v161 = vshrl.u32 %v160, 7
    %v162 = vsub.s32 0, %v161
    %v163 = vrot.slane %v159, %v162
    %vm164 = vcmp.eq.s32.totalorder %v163, 1
    %vm165 = vmor %vm157, %vm164
    %v166 = vsel %vm165, %v147, 0.0
    %v167 = vld [vmem:[#allocation5] sm:$0xff]
    %v168 = vld [vmem:[#allocation5 + $0x8] sm:$0xff]
    %v169 = vld [vmem:[#allocation5 + $0x10] sm:$0xff]
    %v170 = vld [vmem:[#allocation5 + $0x18] sm:$0xff]
    %v171 = vld [vmem:[#allocation5 + $0x20] sm:$0xff]
    %v172 = vld [vmem:[#allocation5 + $0x28] sm:$0xff]
    %v173 = vld [vmem:[#allocation5 + $0x30] sm:$0xff]
    %v174 = vld [vmem:[#allocation5 + $0x38] sm:$0xff]
    %v175 = vld [vmem:[#allocation5 + $0x40] sm:$0xff]
    %v176 = vld [vmem:[#allocation5 + $0x48] sm:$0xff]
    %v177 = vld [vmem:[#allocation5 + $0x50] sm:$0xff]
    %v178 = vld [vmem:[#allocation5 + $0x58] sm:$0xff]
    %v179 = vld [vmem:[#allocation5 + $0x60] sm:$0xff]
    %v180 = vld [vmem:[#allocation5 + $0x68] sm:$0xff]
    %v181 = vld [vmem:[#allocation5 + $0x70] sm:$0xff]
    %v182 = vld [vmem:[#allocation5 + $0x78] sm:$0xff]
    %v183 = vld [vmem:[%s5] sm:$0x1]
    %v184 = vlaneseq
    %v185 = vshrl.u32 %v184, 7
    %v186 = vsub.s32 0, %v185
    %v187 = vrot.slane %v183, %v186
    %vm188 = vcmp.eq.s32.totalorder %v156, %v187
    %v189 = vsel %vm188, 1, 0
    %v190 = vcvt.s32.f32 %v189
    %v191 = vld [vmem:[%s7] sm:$0xff]
    %vm192 = vcmask 64512
    %v194 = vsel %vm192, %v190, 0
    %196 = vmatprep.subr.mxu0 0.0
    %197 = vmatpush1.msra.mxu0 %v191
    %198 = vmatprep.subr.mxu0 0.0
    %199 = vmatpush1.msra.mxu0 0.0
    %200 = vmatprep.subr.mxu0 0.0
    %201 = vmatpush1.msra.mxu0 0.0
    %202 = vmatprep.subr.mxu0 0.0
    %203 = vmatpush1.msra.mxu0 0.0
    %204 = vmatprep.subr.mxu0 0.0
    %205 = vmatpush1.msra.mxu0 0.0
    %206 = vmatprep.subr.mxu0 0.0
    %207 = vmatpush1.msra.mxu0 0.0
    %208 = vmatprep.subr.mxu0 0.0
    %209 = vmatpush1.msra.mxu0 0.0
    %210 = vmatprep.subr.mxu0 0.0
    %211 = vmatpush1.msra.mxu0 0.0
    %212 = vmatprep.subr.mxu0 0.0
    %213 = vmatpush1.msra.mxu0 0.0
    %214 = vmatprep.subr.mxu0 0.0
    %215 = vmatpush1.msra.mxu0 0.0
    %216 = vmatprep.subr.mxu0 0.0
    %217 = vmatpush1.msra.mxu0 0.0
    %218 = vmatprep.subr.mxu0 0.0
    %219 = vmatpush1.msra.mxu0 0.0
    %220 = vmatprep.subr.mxu0 0.0
    %221 = vmatpush1.msra.mxu0 0.0
    %222 = vmatprep.subr.mxu0 0.0
    %223 = vmatpush1.msra.mxu0 0.0
    %224 = vmatprep.subr.mxu0 0.0
    %225 = vmatpush1.msra.mxu0 0.0
    %226 = vmatprep.subr.mxu0 0.0
    %227 = vmatpush1.msra.mxu0 0.0
    %228 = vmatprep.subr.mxu0 0.0
    %229 = vmatpush1.msra.mxu0 0.0
    %230 = vmatprep.subr.mxu0 0.0
    %231 = vmatpush1.msra.mxu0 0.0
    %232 = vmatprep.subr.mxu0 0.0
    %233 = vmatpush1.msra.mxu0 0.0
    %234 = vmatprep.subr.mxu0 0.0
    %235 = vmatpush1.msra.mxu0 0.0
    %236 = vmatprep.subr.mxu0 0.0
    %237 = vmatpush1.msra.mxu0 0.0
    %238 = vmatprep.subr.mxu0 0.0
    %239 = vmatpush1.msra.mxu0 0.0
    %240 = vmatprep.subr.mxu0 0.0
    %241 = vmatpush1.msra.mxu0 0.0
    %242 = vmatprep.subr.mxu0 0.0
    %243 = vmatpush1.msra.mxu0 0.0
    %244 = vmatprep.subr.mxu0 0.0
    %245 = vmatpush1.msra.mxu0 0.0
    %246 = vmatprep.subr.mxu0 0.0
    %247 = vmatpush1.msra.mxu0 0.0
    %248 = vmatprep.subr.mxu0 0.0
    %249 = vmatpush1.msra.mxu0 0.0
    %250 = vmatprep.subr.mxu0 0.0
    %251 = vmatpush1.msra.mxu0 0.0
    %252 = vmatprep.subr.mxu0 0.0
    %253 = vmatpush1.msra.mxu0 0.0
    %254 = vmatprep.subr.mxu0 0.0
    %255 = vmatpush1.msra.mxu0 0.0
    %256 = vmatprep.subr.mxu0 0.0
    %257 = vmatpush1.msra.mxu0 0.0
    %258 = vmatprep.subr.mxu0 0.0
    %259 = vmatpush1.msra.mxu0 0.0
    %260 = vmatprep.mubr.f32.mxu0 0.0
    %261 = vmatmul.mubr.f32.gmra.mrb[0].mxu0 %v194
    %v262 = vpop.f32.mrb[0].mxu0
    %v263 = vadd.f32 0.0, %v262
    %v264 = vpop.f32.mrb[0].mxu0
    %265 = vdwg.mxu0
    %266 = vmatprep.subr.mxu0 0.0
    %267 = vmatpush1.msra.mxu0 %v167
    %268 = vmatprep.subr.mxu0 0.0
    %269 = vmatpush1.msra.mxu0 %v168
    %270 = vmatprep.subr.mxu0 0.0
    %271 = vmatpush1.msra.mxu0 %v169
    %272 = vmatprep.subr.mxu0 0.0
    %273 = vmatpush1.msra.mxu0 %v170
    %274 = vmatprep.subr.mxu0 0.0
    %275 = vmatpush1.msra.mxu0 %v171
    %276 = vmatprep.subr.mxu0 0.0
    %277 = vmatpush1.msra.mxu0 %v172
    %278 = vmatprep.subr.mxu0 0.0
    %279 = vmatpush1.msra.mxu0 %v173
    %280 = vmatprep.subr.mxu0 0.0
    %281 = vmatpush1.msra.mxu0 %v174
    %282 = vmatprep.subr.mxu0 0.0
    %283 = vmatpush1.msra.mxu0 %v175
    %284 = vmatprep.subr.mxu0 0.0
    %285 = vmatpush1.msra.mxu0 %v176
    %286 = vmatprep.subr.mxu0 0.0
    %287 = vmatpush1.msra.mxu0 %v177
    %288 = vmatprep.subr.mxu0 0.0
    %289 = vmatpush1.msra.mxu0 %v178
    %290 = vmatprep.subr.mxu0 0.0
    %291 = vmatpush1.msra.mxu0 %v179
    %292 = vmatprep.subr.mxu0 0.0
    %293 = vmatpush1.msra.mxu0 %v180
    %294 = vmatprep.subr.mxu0 0.0
    %295 = vmatpush1.msra.mxu0 %v181
    %296 = vmatprep.subr.mxu0 0.0
    %297 = vmatpush1.msra.mxu0 %v182
    %298 = vmatprep.subr.mxu0 0.0
    %299 = vmatpush1.msra.mxu0 0.0
    %300 = vmatprep.subr.mxu0 0.0
    %301 = vmatpush1.msra.mxu0 0.0
    %302 = vmatprep.subr.mxu0 0.0
    %303 = vmatpush1.msra.mxu0 0.0
    %304 = vmatprep.subr.mxu0 0.0
    %305 = vmatpush1.msra.mxu0 0.0
    %306 = vmatprep.subr.mxu0 0.0
    %307 = vmatpush1.msra.mxu0 0.0
    %308 = vmatprep.subr.mxu0 0.0
    %309 = vmatpush1.msra.mxu0 0.0
    %310 = vmatprep.subr.mxu0 0.0
    %311 = vmatpush1.msra.mxu0 0.0
    %312 = vmatprep.subr.mxu0 0.0
    %313 = vmatpush1.msra.mxu0 0.0
    %314 = vmatprep.subr.mxu0 0.0
    %315 = vmatpush1.msra.mxu0 0.0
    %316 = vmatprep.subr.mxu0 0.0
    %317 = vmatpush1.msra.mxu0 0.0
    %318 = vmatprep.subr.mxu0 0.0
    %319 = vmatpush1.msra.mxu0 0.0
    %320 = vmatprep.subr.mxu0 0.0
    %321 = vmatpush1.msra.mxu0 0.0
    %322 = vmatprep.subr.mxu0 0.0
    %323 = vmatpush1.msra.mxu0 0.0
    %324 = vmatprep.subr.mxu0 0.0
    %325 = vmatpush1.msra.mxu0 0.0
    %326 = vmatprep.subr.mxu0 0.0
    %327 = vmatpush1.msra.mxu0 0.0
    %328 = vmatprep.subr.mxu0 0.0
    %329 = vmatpush1.msra.mxu0 0.0
    %330 = vmatprep.mubr.f32.mxu0 0.0
    %331 = vmatmul.mubr.f32.gmra.mrb[0].mxu0 %v166
    %v332 = vpop.f32.mrb[0].mxu0
    %v333 = vadd.f32 %v263, %v332
    %v334 = vpop.f32.mrb[0].mxu0
    %335 = vdwg.mxu0
    %v336 = vld [vmem:[%s8] sm:$0x1]
    %v338 = vlaneseq
    %v339 = vshrl.u32 %v338, 7
    %v340 = vsub.s32 0, %v339
    %v341 = vrot.slane %v336, %v340
    %v343 = vadd.f32 %v333, %v341
    %344 = vst [vmem:[#allocation7] sm:$0xff] %v343
    // Predicated region
    $region46: #{tpu_custom_call.1} parent=1 // pred_check
      _
    $region47: #{tpu_custom_call.1} parent=1 // pred_check_branch
      %346 = sbr.rel (0) target = $region49
    $region48: #{tpu_custom_call.1} parent=1 // pred_region
      %s348 = ssub.s32 128, 128
      %349 = vsyncadd [#allocation4], %s348
      %s351 = sshll.u32 [#allocation7], 4
      %s352 = int_to_ptr.vmem [resolvable:$true] %s351
      %354 = dma.vmem_to_hbm [thread:$0]  %s352, 128, %s9, [#allocation4]
    $region49: #{tpu_custom_call.1} parent=1 // pred_fallthru
      _
    // Predicated region
    $region50: #{tpu_custom_call.1} parent=1 // pred_check
      _
    $region51: #{tpu_custom_call.1} parent=1 // pred_check_branch
      %356 = sbr.rel (0) target = $region53
    $region52: #{tpu_custom_call.1} parent=1 // pred_region
      %357 = dma.done [#allocation4], 128
    $region53: #{tpu_custom_call.1} parent=1 // pred_fallthru
      _
    %358 = vsyncpa [#allocation3], 1
    %359 = vsyncpa [#allocation6], 1
    %360 = vsyncpa [#allocation4], 1

</llo_original>
